<compile_context>
chip_gen: v5e
topology: v5e:2x2
jax: 0.10.0
libtpu: 0.0.40
codegen_flags: <defaults>
</compile_context>

<pallas_src>
import jax
import jax.numpy as jnp
from jax.experimental import pallas as pl
from jax.experimental.pallas import tpu as pltpu


def _round_up(x, m):
    return (x + m - 1) // m * m


def _fc_relu_kernel(x_ref, w_ref, b_ref, o_ref):
    # Hot path: (TB, K) @ (K, Zp) on the MXU (f32 accumulate), bias + ReLU on
    # the VPU, single cast at the store.
    y = jnp.dot(x_ref[...], w_ref[...], preferred_element_type=jnp.float32)
    y = y + b_ref[...].astype(jnp.float32)          # (TB, Zp) + (1, Zp) broadcast
    o_ref[...] = jnp.maximum(y, 0.0).astype(o_ref.dtype)


def init_super_encoder_head_params(key, z_size, in_size=512, dtype=jnp.float32):
    """PyTorch nn.Linear-style init (U(-1/sqrt(in), 1/sqrt(in))).

    Returns the PyTorch-layout f32 params (for reference checks) and the
    kernel-ready params in `dtype`: weight pre-transposed to (in_size, Zp) and
    bias padded to (1, Zp), with Zp = round_up(z_size, 128) (lane-dense output,
    never padded beyond the next multiple of 128). Done ONCE, not per forward.
    """
    kw, kb = jax.random.split(key)
    bound = 1.0 / (in_size ** 0.5)
    weight = jax.random.uniform(kw, (z_size, in_size), jnp.float32, -bound, bound)
    bias = jax.random.uniform(kb, (z_size,), jnp.float32, -bound, bound)

    zp = _round_up(max(z_size, 128), 128)
    w_t_padded = jnp.zeros((in_size, zp), dtype).at[:, :z_size].set(
        weight.T.astype(dtype))
    b_padded = jnp.zeros((1, zp), dtype).at[:, :z_size].set(bias.astype(dtype))
    return weight, bias, w_t_padded, b_padded


def super_encoder_forward(feat_maps, w_t_padded, b_padded, z_size, *,
                          tb_target=None, return_padded=False):
    """feat_maps: (B, 512, 1, 1) backbone output; returns (B, z_size) in the
    weight dtype (or the (B, Zp) padded slab if return_padded=True)."""
    B = feat_maps.shape[0]
    dtype = w_t_padded.dtype
    x = feat_maps.reshape(B, -1).astype(dtype)       # torch.flatten(., 1) — cheap glue
    K = x.shape[1]
    Zp = w_t_padded.shape[1]

    itemsize = jnp.dtype(dtype).itemsize
    sublane = max(8, 32 // itemsize)                 # 8 (f32) / 16 (bf16) / 32 (int8)
    if tb_target is None:
        tb_target = 2048 if itemsize <= 2 else 1024  # ~2-4 MiB x tiles

    # Evenly-sized, sublane-aligned batch tiles; NO jnp.pad — the partial last
    # block is handled by Pallas masking (OOB input rows only ever land in
    # masked output rows, which are never written back).
    n_tiles = pl.cdiv(B, tb_target)
    if B >= 2 * sublane:
        n_tiles = max(n_tiles, 2)   # >=2 grid steps -> v7x megacore split + pipelining
    TB = _round_up(pl.cdiv(B, n_tiles), sublane)
    grid = pl.cdiv(B, TB)

    # Scoped-VMEM budget from the *actual* working set: double-buffered x/out
    # tiles + (double-buffered, constant-index) weight/bias, plus headroom.
    # Clamped to v7x's 64 MiB per TensorCore — never sized for v5e/v6e's 128.
    # (At large Zp, pipeline_mode=pl.Buffered(1) on the weight/bias specs would
    #  claw back one redundant buffer; negligible at Zp=128.)
    buf_bytes = (2 * TB * K + 2 * TB * Zp + 2 * (K * Zp + Zp)) * itemsize
    vmem_limit = min(max(_round_up(buf_bytes, 1 << 20) + (4 << 20), 16 << 20),
                     64 << 20)

    out = pl.pallas_call(
        _fc_relu_kernel,
        out_shape=jax.ShapeDtypeStruct((B, Zp), dtype),
        grid=(grid,),
        in_specs=[
            pl.BlockSpec((TB, K), lambda i: (i, 0)),    # streamed batch tiles
            pl.BlockSpec((K, Zp), lambda i: (0, 0)),    # weight: VMEM-resident
            pl.BlockSpec((1, Zp), lambda i: (0, 0)),    # bias:   VMEM-resident
        ],
        out_specs=pl.BlockSpec((TB, Zp), lambda i: (i, 0)),
        compiler_params=pltpu.CompilerParams(
            dimension_semantics=("parallel",),          # megacore-shardable batch axis
            vmem_limit_bytes=vmem_limit,
        ),
    )(x, w_t_padded, b_padded)

    if return_padded or Zp == z_size:
        return out                      # no extra HBM pass over the output
    return out[:, :z_size]


if __name__ == "__main__":
    key = jax.random.PRNGKey(0)
    k_feat, k_p = jax.random.split(key)
    z_size = 64

    # ---- f32 path: small batch (grid=1), tight tolerance -------------------
    batch = 8
    feat_maps = jax.random.normal(k_feat, (batch, 512, 1, 1), jnp.float32)
    weight, bias, w_t_padded, b_padded = init_super_encoder_head_params(
        k_p, z_size, dtype=jnp.float32)
    out = super_encoder_forward(feat_maps, w_t_padded, b_padded, z_size)
    jax.block_until_ready(out)

    ref = jnp.maximum(feat_maps.reshape(batch, -1) @ weight.T + bias, 0.0)
    assert out.shape == (batch, z_size)
    assert jnp.allclose(out, ref, atol=1e-5, rtol=1e-5)

    # ---- bf16 path: odd batch -> grid=2 with a partial last tile, loose tol -
    batch_bf = 40
    feat_bf = jax.random.normal(k_feat, (batch_bf, 512, 1, 1), jnp.float32)
    _, _, w_t_bf, b_bf = init_super_encoder_head_params(
        k_p, z_size, dtype=jnp.bfloat16)
    out_bf = super_encoder_forward(feat_bf, w_t_bf, b_bf, z_size)
    jax.block_until_ready(out_bf)

    ref_bf = jnp.maximum(feat_bf.reshape(batch_bf, -1) @ weight.T + bias, 0.0)
    assert out_bf.shape == (batch_bf, z_size)
    assert out_bf.dtype == jnp.bfloat16
    assert jnp.allclose(out_bf.astype(jnp.float32), ref_bf, atol=5e-2, rtol=5e-2)

    print("KERNEL_OK")
</pallas_src>

<mosaic_0001>
module attributes {stable_mosaic.version = 11 : i64} {
  func.func @_fc_relu_kernel(%arg0: i32, %arg1: memref<8x512xf32, #tpu.memory_space<vmem>>, %arg2: memref<512x128xf32, #tpu.memory_space<vmem>>, %arg3: memref<1x128xf32, #tpu.memory_space<vmem>>, %arg4: memref<8x128xf32, #tpu.memory_space<vmem>>) attributes {dimension_semantics = [#tpu.dimension_semantics<parallel>], iteration_bounds = array<i64: 1>, scalar_prefetch = 0 : i64, scratch_operands = 0 : i64, tpu.core_type = #tpu.core_type<tc>, window_params = [{transform_indices = @transform_0, window_bounds = array<i64: 8, 512>}, {pipeline_mode = #tpu.pipeline_mode<synchronous>, transform_indices = @transform_1, window_bounds = array<i64: 512, 128>}, {pipeline_mode = #tpu.pipeline_mode<synchronous>, transform_indices = @transform_2, window_bounds = array<i64: 1, 128>}, {transform_indices = @transform_3, window_bounds = array<i64: 8, 128>}]} {
    %c0 = arith.constant 0 : index
    %c0_0 = arith.constant 0 : index
    %0 = vector.load %arg1[%c0, %c0_0] : memref<8x512xf32, #tpu.memory_space<vmem>>, vector<8x512xf32>
    %c0_1 = arith.constant 0 : index
    %c0_2 = arith.constant 0 : index
    %1 = vector.load %arg2[%c0_1, %c0_2] : memref<512x128xf32, #tpu.memory_space<vmem>>, vector<512x128xf32>
    %cst = arith.constant dense<0.000000e+00> : vector<8x128xf32>
    %2 = tpu.matmul %0, %1, %cst {dimension_numbers = #tpu.dot_dimension_numbers<[1], [0], [0], [1], [0, 0, 1, 1], [], []>} : vector<8x512xf32>, vector<512x128xf32>, vector<8x128xf32> -> vector<8x128xf32>
    %c0_3 = arith.constant 0 : index
    %c0_4 = arith.constant 0 : index
    %3 = vector.load %arg3[%c0_3, %c0_4] : memref<1x128xf32, #tpu.memory_space<vmem>>, vector<1x128xf32>
    %4 = vector.broadcast %3 : vector<1x128xf32> to vector<8x128xf32>
    %5 = arith.addf %2, %4 : vector<8x128xf32>
    %cst_5 = arith.constant 0.000000e+00 : f32
    %6 = vector.broadcast %cst_5 : f32 to vector<8x128xf32>
    %7 = arith.maximumf %5, %6 : vector<8x128xf32>
    %c0_6 = arith.constant 0 : index
    %c0_7 = arith.constant 0 : index
    %8 = vector.load %arg4[%c0_6, %c0_7] : memref<8x128xf32, #tpu.memory_space<vmem>>, vector<8x128xf32>
    tpu.vector_store %arg4[%c0_6, %c0_7], %7 {strides = array<i32>} : memref<8x128xf32, #tpu.memory_space<vmem>>, vector<8x128xf32>,
    return
  }
  func.func @transform_0(%arg0: i32) -> (i32, i32) {
    %c0_i32 = arith.constant 0 : i32
    %c0_i32_0 = arith.constant 0 : i32
    return %arg0, %c0_i32 : i32, i32
  }
  func.func @transform_1(%arg0: i32) -> (i32, i32) {
    %c0_i32 = arith.constant 0 : i32
    %c0_i32_0 = arith.constant 0 : i32
    %c0_i32_1 = arith.constant 0 : i32
    return %c0_i32, %c0_i32_0 : i32, i32
  }
  func.func @transform_2(%arg0: i32) -> (i32, i32) {
    %c0_i32 = arith.constant 0 : i32
    %c0_i32_0 = arith.constant 0 : i32
    %c0_i32_1 = arith.constant 0 : i32
    return %c0_i32, %c0_i32_0 : i32, i32
  }
  func.func @transform_3(%arg0: i32) -> (i32, i32) {
    %c0_i32 = arith.constant 0 : i32
    %c0_i32_0 = arith.constant 0 : i32
    return %arg0, %c0_i32 : i32, i32
  }
}

</mosaic_0001>

<llo_original>
// kernel: tpu_custom_call.1
$region0: #{tpu_custom_call.1}
  #allocation0 [shape = 'u32[]', space=smem, size = 0x4, offset = 0x4, fixed_abs, tag = 'smem constant byte address 0x4 - core index']
  #allocation1 [shape = 'u32[72,128]{1,0:T(1,128)}', space=vmem, size = 0x9000, scoped, tag = 'internal scratch']
  %s0 = inlined_call_operand.hbm [shape: f32[8,512], index: 0, kind: input, shape index: {}]
  %s1 = inlined_call_operand.hbm [shape: f32[512,128], index: 1, kind: input, shape index: {}]
  %s2 = inlined_call_operand.vmem [shape: f32[1,128], index: 2, kind: input, shape index: {}]
  %s3 = inlined_call_operand.hbm [shape: f32[8,128], index: 3, kind: output, shape index: {}]
  %s4 = sld [smem:[#allocation0]]
  $region30: #{tpu_custom_call.1} parent=0
    _
  %s6 = ssub.s32 1, %s4
  %s7 = scalar_select 0, %s6, %s4
  $region1: #{tpu_custom_call.1} parent=0
    #allocation2 [shape = 'u8[16384]{0}', space=vmem, size = 0x4000, scoped, tag = 'input window, operand 0, single buffered']
    #allocation3 [shape = 's32[1]{0}', space=sflag, size = 0x4, scoped, tag = 'scoped memory for tpu_custom_call.1']
    #allocation4 [shape = 's32[1]{0}', space=sflag, size = 0x4, scoped, tag = 'scoped memory for tpu_custom_call.1']
    #allocation5 [shape = 'u8[262144]{0}', space=vmem, size = 0x40000, scoped, tag = 'input window, operand 1, single buffered']
    #allocation6 [shape = 's32[1]{0}', space=sflag, size = 0x4, scoped, tag = 'scoped memory for tpu_custom_call.1']
    #allocation7 [shape = 'u8[4096]{0}', space=vmem, size = 0x1000, scoped, tag = 'output window, operand 0, single buffered']
    %8 = vsyncpa [#allocation3], 0
    %9 = vsyncpa [#allocation6], 0
    %10 = vsyncpa [#allocation4], 0
    // Predicated region
    $region2: #{tpu_custom_call.1} parent=1 // pred_check
      _
    $region3: #{tpu_custom_call.1} parent=1 // pred_check_branch
      %12 = sbr.rel (0) target = $region5
    $region4: #{tpu_custom_call.1} parent=1 // pred_region
      %14 = vsyncadd [#allocation3], 0
      %s16 = sshll.u32 %s0, 4
      %s17 = int_to_ptr.hbm [resolvable:$true] %s16
      %s18 = sshll.u32 [#allocation2], 4
      %s19 = int_to_ptr.vmem [resolvable:$true] %s18
      %21 = dma.hbm_to_vmem [thread:$0]  %s17, 512, %s19, [#allocation3]
    $region5: #{tpu_custom_call.1} parent=1 // pred_fallthru
      _
    // Predicated region
    $region6: #{tpu_custom_call.1} parent=1 // pred_check
      _
    $region7: #{tpu_custom_call.1} parent=1 // pred_check_branch
      %23 = sbr.rel (0) target = $region9
    $region8: #{tpu_custom_call.1} parent=1 // pred_region
      %25 = vsyncadd [#allocation6], 0
      %s26 = sshll.u32 %s1, 4
      %s27 = int_to_ptr.hbm [resolvable:$true] %s26
      %s28 = sshll.u32 [#allocation5], 4
      %s29 = int_to_ptr.vmem [resolvable:$true] %s28
      %34 = dma.hbm_to_vmem [thread:$0]  %s27, 8192, %s29, [#allocation6], 128, 128, 8
    $region9: #{tpu_custom_call.1} parent=1 // pred_fallthru
      _
    // Predicated region
    $region10: #{tpu_custom_call.1} parent=1 // pred_check
      _
    $region11: #{tpu_custom_call.1} parent=1 // pred_check_branch
      %36 = sbr.rel (0) target = $region13
    $region12: #{tpu_custom_call.1} parent=1 // pred_region
      _
    $region13: #{tpu_custom_call.1} parent=1 // pred_fallthru
      _
    // Predicated region
    $region14: #{tpu_custom_call.1} parent=1 // pred_check
      _
    $region15: #{tpu_custom_call.1} parent=1 // pred_check_branch
      %38 = sbr.rel (0) target = $region17
    $region16: #{tpu_custom_call.1} parent=1 // pred_region
      %40 = dma.done [#allocation3], 512
    $region17: #{tpu_custom_call.1} parent=1 // pred_fallthru
      _
    // Predicated region
    $region18: #{tpu_custom_call.1} parent=1 // pred_check
      _
    $region19: #{tpu_custom_call.1} parent=1 // pred_check_branch
      %42 = sbr.rel (0) target = $region21
    $region20: #{tpu_custom_call.1} parent=1 // pred_region
      %44 = dma.done [#allocation6], 8192
    $region21: #{tpu_custom_call.1} parent=1 // pred_fallthru
      _
    %v45 = vld [vmem:[#allocation2] sm:$0xff]
    %v46 = vld [vmem:[#allocation2 + $0x8] sm:$0xff]
    %v47 = vld [vmem:[#allocation2 + $0x10] sm:$0xff]
    %v48 = vld [vmem:[#allocation2 + $0x18] sm:$0xff]
    %v49 = vld [vmem:[#allocation5] sm:$0xff]
    %v50 = vld [vmem:[#allocation5 + $0x8] sm:$0xff]
    %v51 = vld [vmem:[#allocation5 + $0x10] sm:$0xff]
    %v52 = vld [vmem:[#allocation5 + $0x18] sm:$0xff]
    %v53 = vld [vmem:[#allocation5 + $0x20] sm:$0xff]
    %v54 = vld [vmem:[#allocation5 + $0x28] sm:$0xff]
    %v55 = vld [vmem:[#allocation5 + $0x30] sm:$0xff]
    %v56 = vld [vmem:[#allocation5 + $0x38] sm:$0xff]
    %v57 = vld [vmem:[#allocation5 + $0x40] sm:$0xff]
    %v58 = vld [vmem:[#allocation5 + $0x48] sm:$0xff]
    %v59 = vld [vmem:[#allocation5 + $0x50] sm:$0xff]
    %v60 = vld [vmem:[#allocation5 + $0x58] sm:$0xff]
    %v61 = vld [vmem:[#allocation5 + $0x60] sm:$0xff]
    %v62 = vld [vmem:[#allocation5 + $0x68] sm:$0xff]
    %v63 = vld [vmem:[#allocation5 + $0x70] sm:$0xff]
    %v64 = vld [vmem:[#allocation5 + $0x78] sm:$0xff]
    %v65 = vld [vmem:[#allocation5 + $0x80] sm:$0xff]
    %v66 = vld [vmem:[#allocation5 + $0x88] sm:$0xff]
    %v67 = vld [vmem:[#allocation5 + $0x90] sm:$0xff]
    %v68 = vld [vmem:[#allocation5 + $0x98] sm:$0xff]
    %v69 = vld [vmem:[#allocation5 + $0xa0] sm:$0xff]
    %v70 = vld [vmem:[#allocation5 + $0xa8] sm:$0xff]
    %v71 = vld [vmem:[#allocation5 + $0xb0] sm:$0xff]
    %v72 = vld [vmem:[#allocation5 + $0xb8] sm:$0xff]
    %v73 = vld [vmem:[#allocation5 + $0xc0] sm:$0xff]
    %v74 = vld [vmem:[#allocation5 + $0xc8] sm:$0xff]
    %v75 = vld [vmem:[#allocation5 + $0xd0] sm:$0xff]
    %v76 = vld [vmem:[#allocation5 + $0xd8] sm:$0xff]
    %v77 = vld [vmem:[#allocation5 + $0xe0] sm:$0xff]
    %v78 = vld [vmem:[#allocation5 + $0xe8] sm:$0xff]
    %v79 = vld [vmem:[#allocation5 + $0xf0] sm:$0xff]
    %v80 = vld [vmem:[#allocation5 + $0xf8] sm:$0xff]
    %v81 = vld [vmem:[#allocation5 + $0x100] sm:$0xff]
    %v82 = vld [vmem:[#allocation5 + $0x108] sm:$0xff]
    %v83 = vld [vmem:[#allocation5 + $0x110] sm:$0xff]
    %v84 = vld [vmem:[#allocation5 + $0x118] sm:$0xff]
    %v85 = vld [vmem:[#allocation5 + $0x120] sm:$0xff]
    %v86 = vld [vmem:[#allocation5 + $0x128] sm:$0xff]
    %v87 = vld [vmem:[#allocation5 + $0x130] sm:$0xff]
    %v88 = vld [vmem:[#allocation5 + $0x138] sm:$0xff]
    %v89 = vld [vmem:[#allocation5 + $0x140] sm:$0xff]
    %v90 = vld [vmem:[#allocation5 + $0x148] sm:$0xff]
    %v91 = vld [vmem:[#allocation5 + $0x150] sm:$0xff]
    %v92 = vld [vmem:[#allocation5 + $0x158] sm:$0xff]
    %v93 = vld [vmem:[#allocation5 + $0x160] sm:$0xff]
    %v94 = vld [vmem:[#allocation5 + $0x168] sm:$0xff]
    %v95 = vld [vmem:[#allocation5 + $0x170] sm:$0xff]
    %v96 = vld [vmem:[#allocation5 + $0x178] sm:$0xff]
    %v97 = vld [vmem:[#allocation5 + $0x180] sm:$0xff]
    %v98 = vld [vmem:[#allocation5 + $0x188] sm:$0xff]
    %v99 = vld [vmem:[#allocation5 + $0x190] sm:$0xff]
    %v100 = vld [vmem:[#allocation5 + $0x198] sm:$0xff]
    %v101 = vld [vmem:[#allocation5 + $0x1a0] sm:$0xff]
    %v102 = vld [vmem:[#allocation5 + $0x1a8] sm:$0xff]
    %v103 = vld [vmem:[#allocation5 + $0x1b0] sm:$0xff]
    %v104 = vld [vmem:[#allocation5 + $0x1b8] sm:$0xff]
    %v105 = vld [vmem:[#allocation5 + $0x1c0] sm:$0xff]
    %v106 = vld [vmem:[#allocation5 + $0x1c8] sm:$0xff]
    %v107 = vld [vmem:[#allocation5 + $0x1d0] sm:$0xff]
    %v108 = vld [vmem:[#allocation5 + $0x1d8] sm:$0xff]
    %v109 = vld [vmem:[#allocation5 + $0x1e0] sm:$0xff]
    %v110 = vld [vmem:[#allocation5 + $0x1e8] sm:$0xff]
    %v111 = vld [vmem:[#allocation5 + $0x1f0] sm:$0xff]
    %v112 = vld [vmem:[#allocation5 + $0x1f8] sm:$0xff]
    %v113 = vld [vmem:[%s2] sm:$0x1]
    %v115 = vperm.slane %v113, 0
    %117 = vmatpush.msra.mxu0 %v64
    %118 = vmatpush.msra.mxu0 %v63
    %119 = vmatpush.msra.mxu0 %v62
    %120 = vmatpush.msra.mxu0 %v61
    %121 = vmatpush.msra.mxu0 %v60
    %122 = vmatpush.msra.mxu0 %v59
    %123 = vmatpush.msra.mxu0 %v58
    %124 = vmatpush.msra.mxu0 %v57
    %125 = vmatpush.msra.mxu0 %v56
    %126 = vmatpush.msra.mxu0 %v55
    %127 = vmatpush.msra.mxu0 %v54
    %128 = vmatpush.msra.mxu0 %v53
    %129 = vmatpush.msra.mxu0 %v52
    %130 = vmatpush.msra.mxu0 %v51
    %131 = vmatpush.msra.mxu0 %v50
    %132 = vmatpush.msra.mxu0 %v49
    %133 = vmatmul.f32.gmra.mxu0 %v45
    %v134 = vpop.f32.mrf.mxu0
    %v135 = vadd.f32 %v115, %v134
    %136 = vdwg.mxu0
    %137 = vmatpush.msra.mxu0 %v80
    %138 = vmatpush.msra.mxu0 %v79
    %139 = vmatpush.msra.mxu0 %v78
    %140 = vmatpush.msra.mxu0 %v77
    %141 = vmatpush.msra.mxu0 %v76
    %142 = vmatpush.msra.mxu0 %v75
    %143 = vmatpush.msra.mxu0 %v74
    %144 = vmatpush.msra.mxu0 %v73
    %145 = vmatpush.msra.mxu0 %v72
    %146 = vmatpush.msra.mxu0 %v71
    %147 = vmatpush.msra.mxu0 %v70
    %148 = vmatpush.msra.mxu0 %v69
    %149 = vmatpush.msra.mxu0 %v68
    %150 = vmatpush.msra.mxu0 %v67
    %151 = vmatpush.msra.mxu0 %v66
    %152 = vmatpush.msra.mxu0 %v65
    %153 = vmatmul.f32.gmra.mxu0 %v46
    %v154 = vpop.f32.mrf.mxu0
    %v155 = vadd.f32 %v135, %v154
    %156 = vdwg.mxu0
    %157 = vmatpush.msra.mxu0 %v96
    %158 = vmatpush.msra.mxu0 %v95
    %159 = vmatpush.msra.mxu0 %v94
    %160 = vmatpush.msra.mxu0 %v93
    %161 = vmatpush.msra.mxu0 %v92
    %162 = vmatpush.msra.mxu0 %v91
    %163 = vmatpush.msra.mxu0 %v90
    %164 = vmatpush.msra.mxu0 %v89
    %165 = vmatpush.msra.mxu0 %v88
    %166 = vmatpush.msra.mxu0 %v87
    %167 = vmatpush.msra.mxu0 %v86
    %168 = vmatpush.msra.mxu0 %v85
    %169 = vmatpush.msra.mxu0 %v84
    %170 = vmatpush.msra.mxu0 %v83
    %171 = vmatpush.msra.mxu0 %v82
    %172 = vmatpush.msra.mxu0 %v81
    %173 = vmatmul.f32.gmra.mxu0 %v47
    %v174 = vpop.f32.mrf.mxu0
    %v175 = vadd.f32 %v155, %v174
    %176 = vdwg.mxu0
    %177 = vmatpush.msra.mxu0 %v112
    %178 = vmatpush.msra.mxu0 %v111
    %179 = vmatpush.msra.mxu0 %v110
    %180 = vmatpush.msra.mxu0 %v109
    %181 = vmatpush.msra.mxu0 %v108
    %182 = vmatpush.msra.mxu0 %v107
    %183 = vmatpush.msra.mxu0 %v106
    %184 = vmatpush.msra.mxu0 %v105
    %185 = vmatpush.msra.mxu0 %v104
    %186 = vmatpush.msra.mxu0 %v103
    %187 = vmatpush.msra.mxu0 %v102
    %188 = vmatpush.msra.mxu0 %v101
    %189 = vmatpush.msra.mxu0 %v100
    %190 = vmatpush.msra.mxu0 %v99
    %191 = vmatpush.msra.mxu0 %v98
    %192 = vmatpush.msra.mxu0 %v97
    %193 = vmatmul.f32.gmra.mxu0 %v48
    %v194 = vpop.f32.mrf.mxu0
    %v195 = vadd.f32 %v175, %v194
    %196 = vdwg.mxu0
    %v197 = vmax.f32 %v195, 0.0
    %198 = vst [vmem:[#allocation7] sm:$0xff] %v197
    // Predicated region
    $region22: #{tpu_custom_call.1} parent=1 // pred_check
      _
    $region23: #{tpu_custom_call.1} parent=1 // pred_check_branch
      %200 = sbr.rel (0) target = $region25
    $region24: #{tpu_custom_call.1} parent=1 // pred_region
      %202 = vsyncadd [#allocation4], 0
      %s204 = sshll.u32 [#allocation7], 4
      %s205 = int_to_ptr.vmem [resolvable:$true] %s204
      %s206 = sshll.u32 %s3, 4
      %s207 = int_to_ptr.hbm [resolvable:$true] %s206
      %209 = dma.vmem_to_hbm [thread:$0]  %s205, 128, %s207, [#allocation4]
    $region25: #{tpu_custom_call.1} parent=1 // pred_fallthru
      _
    // Predicated region
    $region26: #{tpu_custom_call.1} parent=1 // pred_check
      _
    $region27: #{tpu_custom_call.1} parent=1 // pred_check_branch
      %211 = sbr.rel (0) target = $region29
    $region28: #{tpu_custom_call.1} parent=1 // pred_region
      %213 = dma.done [#allocation4], 128
    $region29: #{tpu_custom_call.1} parent=1 // pred_fallthru
      _
    %214 = vsyncpa [#allocation3], 1
    %215 = vsyncpa [#allocation6], 1
    %216 = vsyncpa [#allocation4], 1

</llo_original>
